<compile_context>
chip_gen: v7x
topology: tpu7x:2x2x1
jax: 0.10.0
libtpu: 0.0.40
codegen_flags: <defaults>
</compile_context>

<pallas_src>
import functools

import jax
import jax.numpy as jnp
from jax.experimental import pallas as pl
from jax.experimental.pallas import tpu as pltpu

_PSP_AUX_WEIGHT = 0.4  # unused on the deeplabv3 path, kept for parity with the spec
IGNORE_INDEX = 255


def _seg_ce_kernel(x_ref, t_ref, w1_ref, b1_ref, w2_ref, b2_ref,
                   logits_ref, parts_ref, *, hw, tile_p):
    # Shapes (pixels on the lane axis):
    #   x_ref:      (1, C_in, TP) f32     t_ref:  (1, 1, TP) int32
    #   w1_ref:     (C_hid, C_in) bf16    b1_ref: (C_hid, 1) f32
    #   w2_ref:     (K, C_hid)    bf16    b2_ref: (K, 1) f32
    #   logits_ref: (1, K, TP) f32
    #   parts_ref:  (1, 128) f32  (lane0 = loss_sum, lane1 = valid_count)

    # --- segmentation head: 1x1 conv -> ReLU -> 1x1 conv (per-pixel matmuls, MXU) ---
    x = x_ref[0].astype(jnp.bfloat16)                            # (C_in, TP)
    h = jnp.dot(w1_ref[...], x, preferred_element_type=jnp.float32)
    h = jnp.maximum(h + b1_ref[...], 0.0)                        # (C_hid, TP) f32
    logits = jnp.dot(w2_ref[...], h.astype(w2_ref.dtype),
                     preferred_element_type=jnp.float32) + b2_ref[...]   # (K, TP) f32
    logits_ref[0] = logits.astype(logits_ref.dtype)

    # --- cross-entropy with ignore_index=255 (f32 elementwise math) ---
    t = t_ref[0]                                                 # (1, TP) int32
    m = jnp.max(logits, axis=0, keepdims=True)                   # (1, TP)
    lse = m + jnp.log(jnp.sum(jnp.exp(logits - m), axis=0, keepdims=True))
    class_iota = jax.lax.broadcasted_iota(jnp.int32, logits.shape, 0)
    onehot = (class_iota == t).astype(jnp.float32)               # (K, TP)
    tgt_logit = jnp.sum(onehot * logits, axis=0, keepdims=True)  # (1, TP)

    # In-kernel tail mask: pixel index within the image + ignore_index.
    pix = pl.program_id(1) * tile_p + jax.lax.broadcasted_iota(jnp.int32, t.shape, 1)
    valid = jnp.logical_and(t != IGNORE_INDEX, pix < hw)         # (1, TP) bool
    # jnp.where (select), NOT multiply: garbage from the clipped edge block may be
    # Inf/NaN and must not reach the sum.
    loss_px = jnp.where(valid, lse - tgt_logit, 0.0)             # (1, TP)
    valid_f = valid.astype(jnp.float32)

    # One lane-packed (1,128) partial per grid step: lane0 loss_sum, lane1 count.
    loss_sum = jnp.sum(loss_px, axis=1, keepdims=True)           # (1, 1)
    count_sum = jnp.sum(valid_f, axis=1, keepdims=True)          # (1, 1)
    lane = jax.lax.broadcasted_iota(jnp.int32, (1, 128), 1)
    parts_ref[...] = jnp.where(lane == 0, loss_sum,
                               jnp.where(lane == 1, count_sum, 0.0))


@functools.partial(jax.jit, static_argnames=("tile_p",))
def full_model_forward(inputs_nchw, target, params, tile_p=8192):
    """FullModel.forward(inputs, target, mode='train') for deeplabv3 / default loss.

    tile_p: pixels per grid step (multiple of 128). Sweep 4K-32K. At real deeplabv3
    channel widths (C_in ~2048) or on v7x (64 MiB VMEM) keep it in the 2K-8K range
    so double-buffering survives; at the toy widths here anything up to 32K fits.
    """
    w1, b1, w2, b2 = params            # channel-major: w1 (C_hid, C_in), w2 (K, C_hid)
    n, c_in, h, w = inputs_nchw.shape
    c_hid = w1.shape[0]
    k = w2.shape[0]
    hw = h * w

    # NCHW -> (N, C_in, H*W): pure view, no HBM relayout pass.
    x = inputs_nchw.reshape(n, c_in, hw)
    t = target.reshape(n, 1, hw).astype(jnp.int32)

    # Effective pixel tile: multiple of 128, no larger than the (rounded-up) image.
    tile_p_eff = min(int(tile_p), pl.cdiv(hw, 128) * 128)
    num_tiles = pl.cdiv(hw, tile_p_eff)

    # Tiny weights/biases: weights bf16 (MXU-native), biases f32 column vectors.
    w1b = w1.astype(jnp.bfloat16)
    w2b = w2.astype(jnp.bfloat16)
    b1f = b1.reshape(c_hid, 1).astype(jnp.float32)
    b2f = b2.reshape(k, 1).astype(jnp.float32)

    kernel = functools.partial(_seg_ce_kernel, hw=hw, tile_p=tile_p_eff)

    logits, parts = pl.pallas_call(
        kernel,
        out_shape=(
            jax.ShapeDtypeStruct((n, k, hw), jnp.float32),
            jax.ShapeDtypeStruct((1, n * num_tiles * 128), jnp.float32),
        ),
        grid=(n, num_tiles),
        in_specs=[
            pl.BlockSpec((1, c_in, tile_p_eff), lambda b, i: (b, 0, i)),
            pl.BlockSpec((1, 1, tile_p_eff), lambda b, i: (b, 0, i)),
            pl.BlockSpec((c_hid, c_in), lambda b, i: (0, 0)),
            pl.BlockSpec((c_hid, 1), lambda b, i: (0, 0)),
            pl.BlockSpec((k, c_hid), lambda b, i: (0, 0)),
            pl.BlockSpec((k, 1), lambda b, i: (0, 0)),
        ],
        out_specs=(
            pl.BlockSpec((1, k, tile_p_eff), lambda b, i: (b, 0, i)),
            pl.BlockSpec((1, 128), lambda b, i: (0, b * num_tiles + i)),
        ),
        compiler_params=pltpu.CompilerParams(
            dimension_semantics=("parallel", "parallel")),
    )(x, t, w1b, b1f, w2b, b2f)

    # reduction='mean' over non-ignored pixels (F.cross_entropy with ignore_index).
    # Note: PyTorch returns NaN if *every* pixel is ignored; we return 0 instead.
    parts2 = parts.reshape(-1, 128)
    loss = jnp.sum(parts2[:, 0]) / jnp.maximum(jnp.sum(parts2[:, 1]), 1.0)

    # (N, K, H*W) is already NCHW order: only a free reshape remains.
    output = logits.reshape(n, k, h, w)
    return output, loss


def init_params(key, c_in, c_hid, k):
    # Channel-major weights, matching PyTorch Conv2d(out, in, 1, 1) layout for 1x1 convs.
    k1, k2 = jax.random.split(key)
    w1 = jax.random.normal(k1, (c_hid, c_in), jnp.float32) * 0.1
    b1 = jnp.zeros((c_hid,), jnp.float32)
    w2 = jax.random.normal(k2, (k, c_hid), jnp.float32) * 0.1
    b2 = jnp.zeros((k,), jnp.float32)
    return w1, b1, w2, b2


def reference_forward(inputs_nchw, target, params):
    """Pure-JAX f32 reference of the same head + CE(ignore_index=255, mean)."""
    w1, b1, w2, b2 = params
    n, c_in, h, w = inputs_nchw.shape
    k = w2.shape[0]
    x = jnp.transpose(inputs_nchw, (0, 2, 3, 1)).reshape(-1, c_in)
    hid = jnp.maximum(x @ w1.T + b1[None, :], 0.0)
    logits = hid @ w2.T + b2[None, :]
    t = target.reshape(-1)
    valid = t != IGNORE_INDEX
    logz = jax.nn.log_softmax(logits, axis=-1)
    t_safe = jnp.where(valid, t, 0)
    nll = -jnp.take_along_axis(logz, t_safe[:, None], axis=-1)[:, 0]
    loss = jnp.sum(jnp.where(valid, nll, 0.0)) / jnp.maximum(
        jnp.sum(valid.astype(jnp.float32)), 1.0)
    out = jnp.transpose(logits.reshape(n, h, w, k), (0, 3, 1, 2))
    return out, loss


def _check(inputs, target, params, tile_p, n, k, h, w):
    output, loss = full_model_forward(inputs, target, params, tile_p=tile_p)
    jax.block_until_ready((output, loss))
    ref_out, ref_loss = reference_forward(inputs, target, params)
    assert output.shape == (n, k, h, w)
    assert loss.shape == ()
    assert bool(jnp.allclose(output, ref_out, atol=5e-2)), \
        float(jnp.max(jnp.abs(output - ref_out)))
    assert bool(jnp.allclose(loss, ref_loss, atol=5e-2)), (float(loss), float(ref_loss))


if __name__ == "__main__":
    key = jax.random.PRNGKey(0)
    kx, kt, km, kp, kx2, kt2 = jax.random.split(key, 6)

    N, C_IN, H, W = 2, 4, 16, 16
    C_HID, NUM_CLASSES = 32, 8

    params = init_params(kp, C_IN, C_HID, NUM_CLASSES)

    # Case 1: H*W divisible by tile_p -> multi-step (2 batch x 2 pixel-tile) grid.
    inputs = jax.random.normal(kx, (N, C_IN, H, W), jnp.float32)
    target = jax.random.randint(kt, (N, H, W), 0, NUM_CLASSES, jnp.int32)
    ignore_mask = jax.random.bernoulli(km, 0.1, (N, H, W))
    target = jnp.where(ignore_mask, IGNORE_INDEX, target)
    _check(inputs, target, params, tile_p=128, n=N, k=NUM_CLASSES, h=H, w=W)

    # Case 2: ragged tail (H*W=100 < 128) -> exercises the in-kernel tail mask.
    H2, W2 = 10, 10
    inputs2 = jax.random.normal(kx2, (1, C_IN, H2, W2), jnp.float32)
    target2 = jax.random.randint(kt2, (1, H2, W2), 0, NUM_CLASSES, jnp.int32)
    _check(inputs2, target2, params, tile_p=8192, n=1, k=NUM_CLASSES, h=H2, w=W2)

    print("KERNEL_OK")
</pallas_src>

<mosaic_0001>
module attributes {stable_mosaic.version = 11 : i64} {
  func.func @_seg_ce_kernel(%arg0: i32, %arg1: i32, %arg2: memref<1x4x128xf32, #tpu.memory_space<vmem>>, %arg3: memref<1x1x128xi32, #tpu.memory_space<vmem>>, %arg4: memref<32x4xbf16, #tpu.memory_space<vmem>>, %arg5: memref<32x1xf32, #tpu.memory_space<vmem>>, %arg6: memref<8x32xbf16, #tpu.memory_space<vmem>>, %arg7: memref<8x1xf32, #tpu.memory_space<vmem>>, %arg8: memref<1x8x128xf32, #tpu.memory_space<vmem>>, %arg9: memref<1x128xf32, #tpu.memory_space<vmem>>) attributes {dimension_semantics = [#tpu.dimension_semantics<parallel>, #tpu.dimension_semantics<parallel>], iteration_bounds = array<i64: 2, 2>, scalar_prefetch = 0 : i64, scratch_operands = 0 : i64, tpu.core_type = #tpu.core_type<tc>, window_params = [{transform_indices = @transform_0, window_bounds = array<i64: 1, 4, 128>}, {transform_indices = @transform_1, window_bounds = array<i64: 1, 1, 128>}, {pipeline_mode = #tpu.pipeline_mode<synchronous>, transform_indices = @transform_2, window_bounds = array<i64: 32, 4>}, {pipeline_mode = #tpu.pipeline_mode<synchronous>, transform_indices = @transform_3, window_bounds = array<i64: 32, 1>}, {pipeline_mode = #tpu.pipeline_mode<synchronous>, transform_indices = @transform_4, window_bounds = array<i64: 8, 32>}, {pipeline_mode = #tpu.pipeline_mode<synchronous>, transform_indices = @transform_5, window_bounds = array<i64: 8, 1>}, {transform_indices = @transform_6, window_bounds = array<i64: 1, 8, 128>}, {transform_indices = @transform_7, window_bounds = array<i64: 1, 128>}]} {
    %c0 = arith.constant 0 : index
    %c0_0 = arith.constant 0 : index
    %c0_1 = arith.constant 0 : index
    %0 = vector.load %arg2[%c0, %c0_0, %c0_1] : memref<1x4x128xf32, #tpu.memory_space<vmem>>, vector<1x4x128xf32>
    %1 = vector.shape_cast %0 : vector<1x4x128xf32> to vector<4x128xf32>
    %2 = arith.truncf %1 : vector<4x128xf32> to vector<4x128xbf16>
    %c0_2 = arith.constant 0 : index
    %c0_3 = arith.constant 0 : index
    %3 = vector.load %arg4[%c0_2, %c0_3] : memref<32x4xbf16, #tpu.memory_space<vmem>>, vector<32x4xbf16>
    %cst = arith.constant dense<0.000000e+00> : vector<32x128xf32>
    %4 = tpu.matmul %3, %2, %cst {dimension_numbers = #tpu.dot_dimension_numbers<[1], [0], [0], [1], [0, 0, 1, 1], [], []>} : vector<32x4xbf16>, vector<4x128xbf16>, vector<32x128xf32> -> vector<32x128xf32>
    %c0_4 = arith.constant 0 : index
    %c0_5 = arith.constant 0 : index
    %5 = vector.load %arg5[%c0_4, %c0_5] : memref<32x1xf32, #tpu.memory_space<vmem>>, vector<32x1xf32>
    %6 = vector.broadcast %5 : vector<32x1xf32> to vector<32x128xf32>
    %7 = arith.addf %4, %6 : vector<32x128xf32>
    %cst_6 = arith.constant 0.000000e+00 : f32
    %8 = vector.broadcast %cst_6 : f32 to vector<32x128xf32>
    %9 = arith.maximumf %7, %8 : vector<32x128xf32>
    %c0_7 = arith.constant 0 : index
    %c0_8 = arith.constant 0 : index
    %10 = vector.load %arg6[%c0_7, %c0_8] : memref<8x32xbf16, #tpu.memory_space<vmem>>, vector<8x32xbf16>
    %11 = arith.truncf %9 : vector<32x128xf32> to vector<32x128xbf16>
    %cst_9 = arith.constant dense<0.000000e+00> : vector<8x128xf32>
    %12 = tpu.matmul %10, %11, %cst_9 {dimension_numbers = #tpu.dot_dimension_numbers<[1], [0], [0], [1], [0, 0, 1, 1], [], []>} : vector<8x32xbf16>, vector<32x128xbf16>, vector<8x128xf32> -> vector<8x128xf32>
    %c0_10 = arith.constant 0 : index
    %c0_11 = arith.constant 0 : index
    %13 = vector.load %arg7[%c0_10, %c0_11] : memref<8x1xf32, #tpu.memory_space<vmem>>, vector<8x1xf32>
    %14 = vector.broadcast %13 : vector<8x1xf32> to vector<8x128xf32>
    %15 = arith.addf %12, %14 : vector<8x128xf32>
    %c0_12 = arith.constant 0 : index
    %c0_13 = arith.constant 0 : index
    %c0_14 = arith.constant 0 : index
    %16 = vector.load %arg8[%c0_12, %c0_13, %c0_14] : memref<1x8x128xf32, #tpu.memory_space<vmem>>, vector<1x8x128xf32>
    %17 = vector.shape_cast %16 : vector<1x8x128xf32> to vector<8x128xf32>
    %18 = vector.shape_cast %15 : vector<8x128xf32> to vector<1x8x128xf32>
    tpu.vector_store %arg8[%c0_12, %c0_13, %c0_14], %18 {strides = array<i32>} : memref<1x8x128xf32, #tpu.memory_space<vmem>>, vector<1x8x128xf32>,
    %c0_15 = arith.constant 0 : index
    %c0_16 = arith.constant 0 : index
    %c0_17 = arith.constant 0 : index
    %19 = vector.load %arg3[%c0_15, %c0_16, %c0_17] : memref<1x1x128xi32, #tpu.memory_space<vmem>>, vector<1x1x128xi32>
    %20 = vector.shape_cast %19 : vector<1x1x128xi32> to vector<1x128xi32>
    %cst_18 = arith.constant dense<0xFF800000> : vector<128xf32>
    %21 = vector.multi_reduction <maximumf>, %15, %cst_18 [0] : vector<8x128xf32> to vector<128xf32>
    %22 = vector.shape_cast %21 : vector<128xf32> to vector<1x128xf32>
    %23 = vector.broadcast %22 : vector<1x128xf32> to vector<8x128xf32>
    %24 = arith.subf %15, %23 : vector<8x128xf32>
    %25 = math.exp %24 : vector<8x128xf32>
    %cst_19 = arith.constant dense<0.000000e+00> : vector<128xf32>
    %26 = vector.multi_reduction <add>, %25, %cst_19 [0] : vector<8x128xf32> to vector<128xf32>
    %27 = vector.shape_cast %26 : vector<128xf32> to vector<1x128xf32>
    %28 = math.log %27 : vector<1x128xf32>
    %29 = arith.addf %22, %28 : vector<1x128xf32>
    %30 = tpu.iota {dimensions = array<i32: 0>} : vector<8x128xi32>
    %31 = vector.broadcast %20 : vector<1x128xi32> to vector<8x128xi32>
    %32 = arith.cmpi eq, %30, %31 : vector<8x128xi32>
    %33 = arith.extui %32 : vector<8x128xi1> to vector<8x128xi32>
    %34 = arith.sitofp %33 : vector<8x128xi32> to vector<8x128xf32>
    %35 = arith.mulf %34, %15 : vector<8x128xf32>
    %cst_20 = arith.constant dense<0.000000e+00> : vector<128xf32>
    %36 = vector.multi_reduction <add>, %35, %cst_20 [0] : vector<8x128xf32> to vector<128xf32>
    %37 = vector.shape_cast %36 : vector<128xf32> to vector<1x128xf32>
    %c128_i32 = arith.constant 128 : i32
    %38 = arith.muli %arg1, %c128_i32 : i32
    %39 = tpu.iota {dimensions = array<i32: 1>} : vector<1x128xi32>
    %40 = vector.broadcast %38 : i32 to vector<1x128xi32>
    %41 = arith.addi %40, %39 : vector<1x128xi32>
    %c255_i32 = arith.constant 255 : i32
    %42 = vector.broadcast %c255_i32 : i32 to vector<1x128xi32>
    %43 = arith.cmpi ne, %20, %42 : vector<1x128xi32>
    %c256_i32 = arith.constant 256 : i32
    %44 = vector.broadcast %c256_i32 : i32 to vector<1x128xi32>
    %45 = arith.cmpi slt, %41, %44 : vector<1x128xi32>
    %46 = arith.andi %43, %45 : vector<1x128xi1>
    %47 = arith.subf %29, %37 : vector<1x128xf32>
    %cst_21 = arith.constant 0.000000e+00 : f32
    %48 = vector.broadcast %cst_21 : f32 to vector<1x128xf32>
    %49 = arith.select %46, %47, %48 : vector<1x128xi1>, vector<1x128xf32>
    %50 = arith.extui %46 : vector<1x128xi1> to vector<1x128xi32>
    %51 = arith.sitofp %50 : vector<1x128xi32> to vector<1x128xf32>
    %cst_22 = arith.constant dense<0.000000e+00> : vector<1xf32>
    %52 = vector.multi_reduction <add>, %49, %cst_22 [1] : vector<1x128xf32> to vector<1xf32>
    %53 = vector.shape_cast %52 : vector<1xf32> to vector<1x1xf32>
    %cst_23 = arith.constant dense<0.000000e+00> : vector<1xf32>
    %54 = vector.multi_reduction <add>, %51, %cst_23 [1] : vector<1x128xf32> to vector<1xf32>
    %55 = vector.shape_cast %54 : vector<1xf32> to vector<1x1xf32>
    %56 = tpu.iota {dimensions = array<i32: 1>} : vector<1x128xi32>
    %c0_i32 = arith.constant 0 : i32
    %57 = vector.broadcast %c0_i32 : i32 to vector<1x128xi32>
    %58 = arith.cmpi eq, %56, %57 : vector<1x128xi32>
    %c1_i32 = arith.constant 1 : i32
    %59 = vector.broadcast %c1_i32 : i32 to vector<1x128xi32>
    %60 = arith.cmpi eq, %56, %59 : vector<1x128xi32>
    %cst_24 = arith.constant 0.000000e+00 : f32
    %61 = vector.shape_cast %55 : vector<1x1xf32> to vector<1x1xf32>
    %62 = vector.broadcast %61 : vector<1x1xf32> to vector<1x128xf32>
    %63 = vector.broadcast %cst_24 : f32 to vector<1x128xf32>
    %64 = arith.select %60, %62, %63 : vector<1x128xi1>, vector<1x128xf32>
    %65 = vector.shape_cast %53 : vector<1x1xf32> to vector<1x1xf32>
    %66 = vector.broadcast %65 : vector<1x1xf32> to vector<1x128xf32>
    %67 = arith.select %58, %66, %64 : vector<1x128xi1>, vector<1x128xf32>
    %c0_25 = arith.constant 0 : index
    %c0_26 = arith.constant 0 : index
    %68 = vector.load %arg9[%c0_25, %c0_26] : memref<1x128xf32, #tpu.memory_space<vmem>>, vector<1x128xf32>
    tpu.vector_store %arg9[%c0_25, %c0_26], %67 {strides = array<i32>} : memref<1x128xf32, #tpu.memory_space<vmem>>, vector<1x128xf32>,
    return
  }
  func.func @transform_0(%arg0: i32, %arg1: i32) -> (i32, i32, i32) {
    %c0_i32 = arith.constant 0 : i32
    %c0_i32_0 = arith.constant 0 : i32
    return %arg0, %c0_i32, %arg1 : i32, i32, i32
  }
  func.func @transform_1(%arg0: i32, %arg1: i32) -> (i32, i32, i32) {
    %c0_i32 = arith.constant 0 : i32
    %c0_i32_0 = arith.constant 0 : i32
    return %arg0, %c0_i32, %arg1 : i32, i32, i32
  }
  func.func @transform_2(%arg0: i32, %arg1: i32) -> (i32, i32) {
    %c0_i32 = arith.constant 0 : i32
    %c0_i32_0 = arith.constant 0 : i32
    %c0_i32_1 = arith.constant 0 : i32
    return %c0_i32, %c0_i32_0 : i32, i32
  }
  func.func @transform_3(%arg0: i32, %arg1: i32) -> (i32, i32) {
    %c0_i32 = arith.constant 0 : i32
    %c0_i32_0 = arith.constant 0 : i32
    %c0_i32_1 = arith.constant 0 : i32
    return %c0_i32, %c0_i32_0 : i32, i32
  }
  func.func @transform_4(%arg0: i32, %arg1: i32) -> (i32, i32) {
    %c0_i32 = arith.constant 0 : i32
    %c0_i32_0 = arith.constant 0 : i32
    %c0_i32_1 = arith.constant 0 : i32
    return %c0_i32, %c0_i32_0 : i32, i32
  }
  func.func @transform_5(%arg0: i32, %arg1: i32) -> (i32, i32) {
    %c0_i32 = arith.constant 0 : i32
    %c0_i32_0 = arith.constant 0 : i32
    %c0_i32_1 = arith.constant 0 : i32
    return %c0_i32, %c0_i32_0 : i32, i32
  }
  func.func @transform_6(%arg0: i32, %arg1: i32) -> (i32, i32, i32) {
    %c0_i32 = arith.constant 0 : i32
    %c0_i32_0 = arith.constant 0 : i32
    return %arg0, %c0_i32, %arg1 : i32, i32, i32
  }
  func.func @transform_7(%arg0: i32, %arg1: i32) -> (i32, i32) {
    %c2_i32 = arith.constant 2 : i32
    %0 = arith.muli %arg0, %c2_i32 : i32
    %1 = arith.addi %0, %arg1 : i32
    %c0_i32 = arith.constant 0 : i32
    %c0_i32_0 = arith.constant 0 : i32
    return %c0_i32, %1 : i32, i32
  }
}

</mosaic_0001>

<llo_original>
// kernel: full_model_forward.1
$region0: #{full_model_forward.1}
  #allocation0 [shape = 'u32[]', space=smem, size = 0x4, offset = 0x4, fixed_abs, tag = 'smem constant byte address 0x4 - core index']
  #allocation1 [shape = 'u32[144,128]{1,0:T(1,128)}', space=vmem, size = 0x12000, scoped, tag = 'internal scratch']
  %s0 = inlined_call_operand.vmem [shape: f32[2,4,256], index: 0, kind: input, shape index: {}]
  %s1 = inlined_call_operand.vmem [shape: s32[2,1,256], index: 1, kind: input, shape index: {}]
  %s2 = inlined_call_operand.vmem [shape: bf16[32,4], index: 2, kind: input, shape index: {}]
  %s3 = inlined_call_operand.vmem [shape: f32[32,1], index: 3, kind: input, shape index: {}]
  %s4 = inlined_call_operand.vmem [shape: bf16[8,32], index: 4, kind: input, shape index: {}]
  %s5 = inlined_call_operand.vmem [shape: f32[8,1], index: 5, kind: input, shape index: {}]
  %s6 = inlined_call_operand.vmem [shape: f32[2,8,256], index: 6, kind: output, shape index: {0}]
  %s7 = inlined_call_operand.vmem [shape: f32[1,512], index: 7, kind: output, shape index: {1}]
  %8 = xla_tuple %s6, %s7
  %s9 = sld [smem:[#allocation0]]
  $region65: #{full_model_forward.1} parent=0
    _
  %s11 = ssub.s32 1, %s9
  %s12 = scalar_select 0, %s11, %s9
  loop: start=0, step=1, limit=6
  $region2: #{full_model_forward.1} parent=0 // loop_pre_header
    _
  $region3: #{full_model_forward.1} parent=0 // loop_header
    %s14 = sphi 0, %s18
    %p15 = scmp.ge.s32.totalorder %s14, 6
    %s21 = sphi 0, %s33
    %s22 = sphi 0, %s29
    %s23 = sphi 0, %s21
    %s24 = sphi 0, %s22
    %s25 = sphi 0, %s23
    %s26 = sphi 0, %s24
    %s38 = sphi 0, %s40
    %s41 = sphi 0, %s38
    %s42 = sphi 0, %s41
    %s58 = sphi 0, %s42
    %s66 = sphi 0, %s68
    %s69 = sphi 0, %s66
    %s70 = sphi 0, %s69
    %s86 = sphi 0, %s70
    %s90 = sphi 0, %s90
    %s92 = sphi 0, %s90
    %s93 = sphi 0, %s92
    %s107 = sphi 0, %s93
    %s111 = sphi 0, %s111
    %s113 = sphi 0, %s111
    %s114 = sphi 0, %s113
    %s128 = sphi 0, %s114
    %s132 = sphi 0, %s132
    %s134 = sphi 0, %s132
    %s135 = sphi 0, %s134
    %s149 = sphi 0, %s135
    %s153 = sphi 0, %s153
    %s155 = sphi 0, %s153
    %s156 = sphi 0, %s155
    %s170 = sphi 0, %s156
    %s178 = sphi 0, %s180
    %s181 = sphi 0, %s178
    %s182 = sphi 0, %s181
    %s198 = sphi 0, %s182
    %s208 = sphi 0, %s210
    %s211 = sphi 0, %s208
    %s212 = sphi 0, %s211
    %s228 = sphi 0, %s212
  $region4: #{full_model_forward.1} parent=0 // loop_header_branch
    %17 = sbr.rel (%p15) target = $region8
  $region5: #{full_model_forward.1} parent=0 // loop_body
    %s19 = ssub.s32 %s14, 1
    %s20 = ssub.s32 %s14, 2
    %s27 = sadd.s32 1, %s22
    %p28 = scmp.ge.s32.totalorder %s27, 2
    %s29 = scalar_select %p28, 0, %s27
    %s30 = sadd.s32 1, %s21
    %s31 = scalar_select %p28, %s30, %s21
    %p32 = scmp.ge.s32.totalorder %s31, 2
    %s33 = scalar_select %p32, 0, %s31
    %s34 = ssub.s32 %s21, %s33
    %s35 = ssub.s32 %s22, %s29
    %s36 = sor.u32 %s34, %s35
    %p37 = scmp.eq.s32.totalorder %s36, 0
    %s39 = sadd.s32 %s38, 1
    %s40 = scalar_select %p37, %s38, %s39
    %p43 = pneg %p37
    %p44 = scmp.eq.s32.totalorder %s14, 3
    %p45 = por %p43, %p44
    %p46 = scmp.ne.s32.totalorder %s38, %s41
    %p47 = scmp.eq.s32.totalorder %s14, 0
    %p48 = por %p46, %p47
    %p49 = scmp.ne.s32.totalorder %s38, %s41
    %p50 = scmp.eq.s32.totalorder %s19, 3
    %p51 = por %p49, %p50
    %p52 = scmp.ne.s32.totalorder %s41, %s42
    %p53 = scmp.eq.s32.totalorder %s19, 0
    %p54 = por %p52, %p53
    %p55 = scmp.ne.s32.totalorder %s41, %s42
    %p56 = scmp.eq.s32.totalorder %s20, 3
    %p57 = por %p55, %p56
    %p59 = scmp.ne.s32.totalorder %s42, %s58
    %p60 = scmp.eq.s32.totalorder %s20, 0
    %p61 = por %p59, %p60
    %s62 = ssub.s32 %s21, %s33
    %s63 = ssub.s32 %s22, %s29
    %s64 = sor.u32 %s62, %s63
    %p65 = scmp.eq.s32.totalorder %s64, 0
    %s67 = sadd.s32 %s66, 1
    %s68 = scalar_select %p65, %s66, %s67
    %p71 = pneg %p65
    %p72 = scmp.eq.s32.totalorder %s14, 3
    %p73 = por %p71, %p72
    %p74 = scmp.ne.s32.totalorder %s66, %s69
    %p75 = scmp.eq.s32.totalorder %s14, 0
    %p76 = por %p74, %p75
    %p77 = scmp.ne.s32.totalorder %s66, %s69
    %p78 = scmp.eq.s32.totalorder %s19, 3
    %p79 = por %p77, %p78
    %p80 = scmp.ne.s32.totalorder %s69, %s70
    %p81 = scmp.eq.s32.totalorder %s19, 0
    %p82 = por %p80, %p81
    %p83 = scmp.ne.s32.totalorder %s69, %s70
    %p84 = scmp.eq.s32.totalorder %s20, 3
    %p85 = por %p83, %p84
    %p87 = scmp.ne.s32.totalorder %s70, %s86
    %p88 = scmp.eq.s32.totalorder %s20, 0
    %p89 = por %p87, %p88
    %s91 = sadd.s32 %s90, 1
    %p94 = scmp.eq.s32.totalorder %s14, 3
    %p95 = scmp.ne.s32.totalorder %s90, %s92
    %p96 = scmp.eq.s32.totalorder %s14, 0
    %p97 = por %p95, %p96
    %p98 = scmp.ne.s32.totalorder %s90, %s92
    %p99 = scmp.eq.s32.totalorder %s19, 3
    %p100 = por %p98, %p99
    %p101 = scmp.ne.s32.totalorder %s92, %s93
    %p102 = scmp.eq.s32.totalorder %s19, 0
    %p103 = por %p101, %p102
    %p104 = scmp.ne.s32.totalorder %s92, %s93
    %p105 = scmp.eq.s32.totalorder %s20, 3
    %p106 = por %p104, %p105
    %p108 = scmp.ne.s32.totalorder %s93, %s107
    %p109 = scmp.eq.s32.totalorder %s20, 0
    %p110 = por %p108, %p109
    %s112 = sadd.s32 %s111, 1
    %p115 = scmp.eq.s32.totalorder %s14, 3
    %p116 = scmp.ne.s32.totalorder %s111, %s113
    %p117 = scmp.eq.s32.totalorder %s14, 0
    %p118 = por %p116, %p117
    %p119 = scmp.ne.s32.totalorder %s111, %s113
    %p120 = scmp.eq.s32.totalorder %s19, 3
    %p121 = por %p119, %p120
    %p122 = scmp.ne.s32.totalorder %s113, %s114
    %p123 = scmp.eq.s32.totalorder %s19, 0
    %p124 = por %p122, %p123
    %p125 = scmp.ne.s32.totalorder %s113, %s114
    %p126 = scmp.eq.s32.totalorder %s20, 3
    %p127 = por %p125, %p126
    %p129 = scmp.ne.s32.totalorder %s114, %s128
    %p130 = scmp.eq.s32.totalorder %s20, 0
    %p131 = por %p129, %p130
    %s133 = sadd.s32 %s132, 1
    %p136 = scmp.eq.s32.totalorder %s14, 3
    %p137 = scmp.ne.s32.totalorder %s132, %s134
    %p138 = scmp.eq.s32.totalorder %s14, 0
    %p139 = por %p137, %p138
    %p140 = scmp.ne.s32.totalorder %s132, %s134
    %p141 = scmp.eq.s32.totalorder %s19, 3
    %p142 = por %p140, %p141
    %p143 = scmp.ne.s32.totalorder %s134, %s135
    %p144 = scmp.eq.s32.totalorder %s19, 0
    %p145 = por %p143, %p144
    %p146 = scmp.ne.s32.totalorder %s134, %s135
    %p147 = scmp.eq.s32.totalorder %s20, 3
    %p148 = por %p146, %p147
    %p150 = scmp.ne.s32.totalorder %s135, %s149
    %p151 = scmp.eq.s32.totalorder %s20, 0
    %p152 = por %p150, %p151
    %s154 = sadd.s32 %s153, 1
    %p157 = scmp.eq.s32.totalorder %s14, 3
    %p158 = scmp.ne.s32.totalorder %s153, %s155
    %p159 = scmp.eq.s32.totalorder %s14, 0
    %p160 = por %p158, %p159
    %p161 = scmp.ne.s32.totalorder %s153, %s155
    %p162 = scmp.eq.s32.totalorder %s19, 3
    %p163 = por %p161, %p162
    %p164 = scmp.ne.s32.totalorder %s155, %s156
    %p165 = scmp.eq.s32.totalorder %s19, 0
    %p166 = por %p164, %p165
    %p167 = scmp.ne.s32.totalorder %s155, %s156
    %p168 = scmp.eq.s32.totalorder %s20, 3
    %p169 = por %p167, %p168
    %p171 = scmp.ne.s32.totalorder %s156, %s170
    %p172 = scmp.eq.s32.totalorder %s20, 0
    %p173 = por %p171, %p172
    %s174 = ssub.s32 %s21, %s33
    %s175 = ssub.s32 %s22, %s29
    %s176 = sor.u32 %s174, %s175
    %p177 = scmp.eq.s32.totalorder %s176, 0
    %s179 = sadd.s32 %s178, 1
    %s180 = scalar_select %p177, %s178, %s179
    %p183 = pneg %p177
    %p184 = scmp.eq.s32.totalorder %s14, 3
    %p185 = por %p183, %p184
    %p186 = scmp.ne.s32.totalorder %s178, %s181
    %p187 = scmp.eq.s32.totalorder %s14, 0
    %p188 = por %p186, %p187
    %p189 = scmp.ne.s32.totalorder %s178, %s181
    %p190 = scmp.eq.s32.totalorder %s19, 3
    %p191 = por %p189, %p190
    %p192 = scmp.ne.s32.totalorder %s181, %s182
    %p193 = scmp.eq.s32.totalorder %s19, 0
    %p194 = por %p192, %p193
    %p195 = scmp.ne.s32.totalorder %s181, %s182
    %p196 = scmp.eq.s32.totalorder %s20, 3
    %p197 = por %p195, %p196
    %p199 = scmp.ne.s32.totalorder %s182, %s198
    %p200 = scmp.eq.s32.totalorder %s20, 0
    %p201 = por %p199, %p200
    %s202 = smul.u32 %s21, 2
    %s203 = sadd.s32 %s202, %s22
    %s204 = smul.u32 %s33, 2
    %s205 = sadd.s32 %s204, %s29
    %s206 = ssub.s32 %s203, %s205
    %p207 = scmp.eq.s32.totalorder %s206, 0
    %s209 = sadd.s32 %s208, 1
    %s210 = scalar_select %p207, %s208, %s209
    %p213 = pneg %p207
    %p214 = scmp.eq.s32.totalorder %s14, 3
    %p215 = por %p213, %p214
    %p216 = scmp.ne.s32.totalorder %s208, %s211
    %p217 = scmp.eq.s32.totalorder %s14, 0
    %p218 = por %p216, %p217
    %p219 = scmp.ne.s32.totalorder %s208, %s211
    %p220 = scmp.eq.s32.totalorder %s19, 3
    %p221 = por %p219, %p220
    %p222 = scmp.ne.s32.totalorder %s211, %s212
    %p223 = scmp.eq.s32.totalorder %s19, 0
    %p224 = por %p222, %p223
    %p225 = scmp.ne.s32.totalorder %s211, %s212
    %p226 = scmp.eq.s32.totalorder %s20, 3
    %p227 = por %p225, %p226
    %p229 = scmp.ne.s32.totalorder %s212, %s228
    %p230 = scmp.eq.s32.totalorder %s20, 0
    %p231 = por %p229, %p230
    %p232 = scmp.le.s32.totalorder 1, %s14
    %p233 = scmp.lt.s32.totalorder %s14, 5
    %p234 = pnand %p232, %p233
    %p235 = pneg %p234
    // Predicated region
    $region9: #{full_model_forward.1} parent=5 // pred_check
      _
    $region10: #{full_model_forward.1} parent=5 // pred_check_branch
      %237 = sbr.rel (%p234) target = $region12
    $region11: #{full_model_forward.1} parent=5 // pred_region
      %s238 = ssub.s32 %s14, 1
      // Predicated region
      $region13: #{full_model_forward.1} parent=11 // pred_check
        %p239 = pneg %p103
      $region14: #{full_model_forward.1} parent=11 // pred_check_branch
        %241 = sbr.rel (%p239) target = $region16
      $region15: #{full_model_forward.1} parent=11 // pred_region
        _
      $region16: #{full_model_forward.1} parent=11 // pred_fallthru
        _
      // Predicated region
      $region17: #{full_model_forward.1} parent=11 // pred_check
        %p242 = pneg %p124
      $region18: #{full_model_forward.1} parent=11 // pred_check_branch
        %244 = sbr.rel (%p242) target = $region20
      $region19: #{full_model_forward.1} parent=11 // pred_region
        _
      $region20: #{full_model_forward.1} parent=11 // pred_fallthru
        _
      // Predicated region
      $region21: #{full_model_forward.1} parent=11 // pred_check
        %p245 = pneg %p145
      $region22: #{full_model_forward.1} parent=11 // pred_check_branch
        %247 = sbr.rel (%p245) target = $region24
      $region23: #{full_model_forward.1} parent=11 // pred_region
        _
      $region24: #{full_model_forward.1} parent=11 // pred_fallthru
        _
      // Predicated region
      $region25: #{full_model_forward.1} parent=11 // pred_check
        %p248 = pneg %p166
      $region26: #{full_model_forward.1} parent=11 // pred_check_branch
        %250 = sbr.rel (%p248) target = $region28
      $region27: #{full_model_forward.1} parent=11 // pred_region
        _
      $region28: #{full_model_forward.1} parent=11 // pred_fallthru
        _
    $region12: #{full_model_forward.1} parent=5 // pred_fallthru
      _
    %p251 = scmp.lt.s32.totalorder %s14, 4
    // Predicated region
    $region29: #{full_model_forward.1} parent=5 // pred_check
      %p252 = pneg %p251
    $region30: #{full_model_forward.1} parent=5 // pred_check_branch
      %254 = sbr.rel (%p252) target = $region32
    $region31: #{full_model_forward.1} parent=5 // pred_region
      // Predicated region
      $region33: #{full_model_forward.1} parent=31 // pred_check
        %p255 = pneg %p48
      $region34: #{full_model_forward.1} parent=31 // pred_check_branch
        %257 = sbr.rel (%p255) target = $region36
      $region35: #{full_model_forward.1} parent=31 // pred_region
        %p258 = scmp.lt.s32.totalorder %s21, 1
        %s259 = scalar_select %p258, %s21, 1
        %p260 = scmp.lt.s32.totalorder %s22, 1
        %s261 = scalar_select %p260, %s22, 1
        %s262 = smul.addr %s259, 2
        %s263 = sadd.s32 %s261, %s262
        %s264 = smul.addr %s263, 4
        %s265 = scalar_lea.vmem %s0, %s264
      $region36: #{full_model_forward.1} parent=31 // pred_fallthru
        _
      // Predicated region
      $region37: #{full_model_forward.1} parent=31 // pred_check
        %p266 = pneg %p76
      $region38: #{full_model_forward.1} parent=31 // pred_check_branch
        %268 = sbr.rel (%p266) target = $region40
      $region39: #{full_model_forward.1} parent=31 // pred_region
        %p269 = scmp.lt.s32.totalorder %s21, 1
        %s270 = scalar_select %p269, %s21, 1
        %p271 = scmp.lt.s32.totalorder %s22, 1
        %s272 = scalar_select %p271, %s22, 1
        %s273 = smul.addr %s270, 2
        %s274 = sadd.s32 %s272, %s273
        %s275 = scalar_lea.vmem %s1, %s274
      $region40: #{full_model_forward.1} parent=31 // pred_fallthru
        _
    $region32: #{full_model_forward.1} parent=5 // pred_fallthru
      _
    %p276 = scmp.le.s32.totalorder 1, %s14
    %p277 = scmp.lt.s32.totalorder %s14, 5
    %p278 = pnand %p276, %p277
    %p279 = pneg %p278
    // Predicated region
    $region41: #{full_model_forward.1} parent=5 // pred_check
      _
    $region42: #{full_model_forward.1} parent=5 // pred_check_branch
      %281 = sbr.rel (%p278) target = $region44
    $region43: #{full_model_forward.1} parent=5 // pred_region
      %s282 = ssub.s32 %s14, 1
      %p283 = scmp.lt.s32.totalorder %s23, 1
      %s284 = scalar_select %p283, %s23, 1
      %p285 = scmp.lt.s32.totalorder %s24, 1
      %s286 = scalar_select %p285, %s24, 1
      %s287 = smul.addr %s284, 2
      %s288 = sadd.s32 %s286, %s287
      %s289 = smul.addr %s288, 4
      %s290 = scalar_lea.vmem %s0, %s289
      %p291 = pneg %p54
      %p292 = pneg %p51
      %p293 = scmp.lt.s32.totalorder %s23, 1
      %s294 = scalar_select %p293, %s23, 1
      %p295 = scmp.lt.s32.totalorder %s24, 1
      %s296 = scalar_select %p295, %s24, 1
      %s297 = smul.addr %s294, 2
      %s298 = sadd.s32 %s296, %s297
      %s299 = scalar_lea.vmem %s1, %s298
      %p300 = pneg %p82
      %p301 = pneg %p79
      %p302 = pneg %p103
      %p303 = pneg %p100
      %p304 = pneg %p124
      %p305 = pneg %p121
      %p306 = pneg %p145
      %p307 = pneg %p142
      %p308 = pneg %p166
      %p309 = pneg %p163
      %p310 = pneg %p194
      %p311 = pneg %p191
      %p312 = scmp.lt.s32.totalorder %s23, 1
      %s313 = scalar_select %p312, %s23, 1
      %p314 = scmp.lt.s32.totalorder %s24, 1
      %s315 = scalar_select %p314, %s24, 1
      %s316 = smul.addr %s313, 2
      %s317 = sadd.s32 %s315, %s316
      %s318 = smul.addr %s317, 8
      %s319 = scalar_lea.vmem %s6, %s318
      %p320 = pneg %p224
      %p321 = pneg %p221
      %s322 = smul.u32 %s23, 2
      %s323 = sadd.s32 %s322, %s24
      %p324 = scmp.lt.s32.totalorder %s323, 3
      %s325 = scalar_select %p324, %s323, 3
      %s326 = scalar_lea.vmem %s7, %s325
      %p327 = scmp.lt.s32.totalorder %s23, 1
      %s328 = scalar_select %p327, %s23, 1
      %p329 = scmp.lt.s32.totalorder %s24, 1
      %s330 = scalar_select %p329, %s24, 1
      %s331 = smul.addr %s328, 2
      %s332 = sadd.s32 %s330, %s331
      %s333 = smul.addr %s332, 4
      %s334 = scalar_lea.vmem %s0, %s333
      %p335 = scmp.lt.s32.totalorder %s23, 1
      %s336 = scalar_select %p335, %s23, 1
      %p337 = scmp.lt.s32.totalorder %s24, 1
      %s338 = scalar_select %p337, %s24, 1
      %s339 = smul.addr %s336, 2
      %s340 = sadd.s32 %s338, %s339
      %s341 = scalar_lea.vmem %s1, %s340
      %p342 = scmp.lt.s32.totalorder %s23, 1
      %s343 = scalar_select %p342, %s23, 1
      %p344 = scmp.lt.s32.totalorder %s24, 1
      %s345 = scalar_select %p344, %s24, 1
      %s346 = smul.addr %s343, 2
      %s347 = sadd.s32 %s345, %s346
      %s348 = smul.addr %s347, 8
      %s349 = scalar_lea.vmem %s6, %s348
      %s350 = smul.u32 %s23, 2
      %s351 = sadd.s32 %s350, %s24
      %p352 = scmp.lt.s32.totalorder %s351, 3
      %s353 = scalar_select %p352, %s351, 3
      %s354 = scalar_lea.vmem %s7, %s353
      %s355 = smul.u32 %s23, 2
      %s356 = sadd.s32 %s355, %s24
      %v358 = vld [vmem:[%s334] sm:$0xf]
      %v359 = vpack.c.bf16 %v358, %v358
      %v360 = vld [vmem:[%s2] sm:$0xf]
      %v361 = vld [vmem:[%s2 + $0x4] sm:$0xf]
      %v362 = vld [vmem:[%s2 + $0x8] sm:$0xf]
      %v363 = vld [vmem:[%s2 + $0xc] sm:$0xf]
      %v364 = vld [vmem:[%s3] sm:$0xff]
      %v365 = vld [vmem:[%s3 + $0x8] sm:$0xff]
      %v366 = vld [vmem:[%s3 + $0x10] sm:$0xff]
      %v367 = vld [vmem:[%s3 + $0x18] sm:$0xff]
      %369 = vset.pattern.permute.xlu0 0
      %370 = vperm.xlu0 %369, %v364
      %v371 = vpop.permute.xlu0 %370
      %374 = vset.pattern.permute.xlu0 0
      %375 = vperm.xlu0 %374, %v365
      %v376 = vpop.permute.xlu0 %375
      %379 = vset.pattern.permute.xlu0 0
      %380 = vperm.xlu0 %379, %v366
      %v381 = vpop.permute.xlu0 %380
      %384 = vset.pattern.permute.xlu0 0
      %385 = vperm.xlu0 %384, %v367
      %v386 = vpop.permute.xlu0 %385
      %v392 = vunpack.c.l.b16 %v360
      %v393 = vunpack.c.l.b16 %v361
      %v394 = vunpack.c.l.b16 %v362
      %v395 = vunpack.c.l.b16 %v363
      %v396 = vpack.c.b16 %v393, %v392
      %v397 = vpack.c.b16 %v395, %v394
      %vm398 = vcmask 31744
      %v400 = vsel %vm398, %v396, 0
      %v403 = vsel %vm398, %v397, 0
      %vm405 = vcmask 1041408
      %v407 = vsel %vm405, %v359, 0
      %409 = vmatprep.subr.bf16.mxu0 0
      %410 = vmatpush1.bf16.msra.mxu0 %v407
      %411 = vmatprep.subr.bf16.mxu0 0
      %412 = vmatpush1.bf16.msra.mxu0 0
      %413 = vmatprep.subr.bf16.mxu0 0
      %414 = vmatpush1.bf16.msra.mxu0 0
      %415 = vmatprep.subr.bf16.mxu0 0
      %416 = vmatpush1.bf16.msra.mxu0 0
      %417 = vmatprep.subr.bf16.mxu0 0
      %418 = vmatpush1.bf16.msra.mxu0 0
      %419 = vmatprep.subr.bf16.mxu0 0
      %420 = vmatpush1.bf16.msra.mxu0 0
      %421 = vmatprep.subr.bf16.mxu0 0
      %422 = vmatpush1.bf16.msra.mxu0 0
      %423 = vmatprep.subr.bf16.mxu0 0
      %424 = vmatpush1.bf16.msra.mxu0 0
      %425 = vmatprep.subr.bf16.mxu0 0
      %426 = vmatpush1.bf16.msra.mxu0 0
      %427 = vmatprep.subr.bf16.mxu0 0
      %428 = vmatpush1.bf16.msra.mxu0 0
      %429 = vmatprep.subr.bf16.mxu0 0
      %430 = vmatpush1.bf16.msra.mxu0 0
      %431 = vmatprep.subr.bf16.mxu0 0
      %432 = vmatpush1.bf16.msra.mxu0 0
      %433 = vmatprep.subr.bf16.mxu0 0
      %434 = vmatpush1.bf16.msra.mxu0 0
      %435 = vmatprep.subr.bf16.mxu0 0
      %436 = vmatpush1.bf16.msra.mxu0 0
      %437 = vmatprep.subr.bf16.mxu0 0
      %438 = vmatpush1.bf16.msra.mxu0 0
      %439 = vmatprep.subr.bf16.mxu0 0
      %440 = vmatpush1.bf16.msra.mxu0 0
      %441 = vmatprep.mubr.bf16.mxu0 0
      %442 = vmatmul.mubr.bf16.gmra.mrb[0].mxu0 %v400
      %v443 = vpop.f32.mrb[0].mxu0
      %v444 = vadd.f32 %v371, %v443
      %v445 = vpop.f32.mrb[0].mxu0
      %v446 = vpop.f32.mrb[0].mxu0
      %v447 = vadd.f32 %v376, %v446
      %v448 = vpop.f32.mrb[0].mxu0
      %449 = vmatprep.mubr.bf16.mxu0 0
      %450 = vmatmul.mubr.bf16.gmra.mrb[0].mxu0 %v403
      %v451 = vpop.f32.mrb[0].mxu0
      %v452 = vadd.f32 %v381, %v451
      %v453 = vpop.f32.mrb[0].mxu0
      %v454 = vpop.f32.mrb[0].mxu0
      %v455 = vadd.f32 %v386, %v454
      %v456 = vpop.f32.mrb[0].mxu0
      %457 = vdwg.mxu0
      %v458 = vmax.f32 %v444, 0.0
      %v459 = vmax.f32 %v447, 0.0
      %v460 = vmax.f32 %v452, 0.0
      %v461 = vmax.f32 %v455, 0.0
      %v462 = vld [vmem:[%s4] sm:$0xf]
      %v463 = vpack.c.bf16 %v459, %v458
      %v464 = vpack.c.bf16 %v461, %v460
      %v465 = vld [vmem:[%s5] sm:$0xff]
      %467 = vset.pattern.permute.xlu0 0
      %468 = vperm.xlu0 %467, %v465
      %v469 = vpop.permute.xlu0 %468
      %vm471 = vcmask 261120
      %v473 = vsel %vm471, %v462, 0
      %475 = vmatprep.subr.bf16.mxu0 0
      %476 = vmatpush1.bf16.msra.mxu0 %v463
      %477 = vmatprep.subr.bf16.mxu0 0
      %478 = vmatpush1.bf16.msra.mxu0 %v464
      %479 = vmatprep.subr.bf16.mxu0 0
      %480 = vmatpush1.bf16.msra.mxu0 0
      %481 = vmatprep.subr.bf16.mxu0 0
      %482 = vmatpush1.bf16.msra.mxu0 0
      %483 = vmatprep.subr.bf16.mxu0 0
      %484 = vmatpush1.bf16.msra.mxu0 0
      %485 = vmatprep.subr.bf16.mxu0 0
      %486 = vmatpush1.bf16.msra.mxu0 0
      %487 = vmatprep.subr.bf16.mxu0 0
      %488 = vmatpush1.bf16.msra.mxu0 0
      %489 = vmatprep.subr.bf16.mxu0 0
      %490 = vmatpush1.bf16.msra.mxu0 0
      %491 = vmatprep.subr.bf16.mxu0 0
      %492 = vmatpush1.bf16.msra.mxu0 0
      %493 = vmatprep.subr.bf16.mxu0 0
      %494 = vmatpush1.bf16.msra.mxu0 0
      %495 = vmatprep.subr.bf16.mxu0 0
      %496 = vmatpush1.bf16.msra.mxu0 0
      %497 = vmatprep.subr.bf16.mxu0 0
      %498 = vmatpush1.bf16.msra.mxu0 0
      %499 = vmatprep.subr.bf16.mxu0 0
      %500 = vmatpush1.bf16.msra.mxu0 0
      %501 = vmatprep.subr.bf16.mxu0 0
      %502 = vmatpush1.bf16.msra.mxu0 0
      %503 = vmatprep.subr.bf16.mxu0 0
      %504 = vmatpush1.bf16.msra.mxu0 0
      %505 = vmatprep.subr.bf16.mxu0 0
      %506 = vmatpush1.bf16.msra.mxu0 0
      %507 = vmatprep.mubr.bf16.mxu0 0
      %508 = vmatmul.mubr.bf16.gmra.mrb[0].mxu0 %v473
      %v509 = vpop.f32.mrb[0].mxu0
      %v510 = vadd.f32 %v469, %v509
      %v511 = vpop.f32.mrb[0].mxu0
      %v512 = vpop.f32.mrb[0].mxu0
      %v513 = vpop.f32.mrb[0].mxu0
      %514 = vdwg.mxu0
      %515 = vst [vmem:[%s349] sm:$0xff] %v510
      %v516 = vld [vmem:[%s341] sm:$0x1]
      %v517 = vrot.slane %v510, 4
      %v518 = vmax.f32 %v510, %v517
      %v519 = vrot.slane %v518, 2
      %v520 = vmax.f32 %v518, %v519
      %v521 = vrot.slane %v520, 1
      %v522 = vmax.f32 %v520, %v521
      %v523 = vsub.f32 %v510, %v522
      %v524 = vmul.f32 %v523, 1.442695
      %v525 = vpow.pop %v524
      %v526 = vrot.slane %v525, 4
      %v527 = vadd.f32 %v525, %v526
      %v528 = vrot.slane %v527, 2
      %v529 = vadd.f32 %v527, %v528
      %v530 = vrot.slane %v529, 1
      %v531 = vadd.f32 %v529, %v530
      %v532 = vlog2.pop %v531
      %v533 = vmul.f32 %v532, 0.6931472
      %v534 = vadd.f32 %v522, %v533
      %v535 = vlaneseq
      %v536 = vshrl.u32 %v535, 7
      %v537 = vlaneseq
      %v538 = vshrl.u32 %v537, 7
      %v539 = vsub.s32 0, %v538
      %v540 = vrot.slane %v516, %v539
      %vm541 = vcmp.eq.s32.totalorder %v536, %v540
      %v542 = vsel %vm541, 1, 0
      %v543 = vcvt.s32.f32 %v542
      %v544 = vmul.f32 %v543, %v510
      %v545 = vrot.slane %v544, 4
      %v546 = vadd.f32 %v544, %v545
      %v547 = vrot.slane %v546, 2
      %v548 = vadd.f32 %v546, %v547
      %v549 = vrot.slane %v548, 1
      %v550 = vadd.f32 %v548, %v549
      %s551 = smul.u32 %s24, 128
      %v552 = vlaneseq
      %v553 = vand.u32 %v552, 127
      %v554 = vstv %s551
      %v555 = vadd.s32 %v554, %v553
      %vm556 = vcmp.ne.s32.totalorder %v516, 255
      %vm557 = vcmp.lt.s32.totalorder %v555, 256
      %vm558 = vmand %vm556, %vm557
      %v559 = vsub.f32 %v534, %v550
      %v560 = vsel %vm558, %v559, 0.0
      %v561 = vsel %vm558, 1, 0
      %v562 = vcvt.s32.f32 %v561
      %vm563 = vcmask 1040384
      %v564 = vsel %vm563, %v560, 0.0
      %565 = vadd.xlane.f32.xlu0 %v564
      %v566 = vpop.xlane.xlu0 %565
      %v567 = vsel %vm563, %v562, 0.0
      %568 = vadd.xlane.f32.xlu0 %v567
      %v569 = vpop.xlane.xlu0 %568
      %vm570 = vcmp.eq.s32.totalorder %v553, 0
      %vm571 = vcmp.eq.s32.totalorder %v553, 1
      %v572 = vsel %vm571, %v569, 0.0
      %v573 = vsel %vm570, %v566, %v572
      %574 = vst [vmem:[%s354] sm:$0x1] %v573
      %p575 = scmp.lt.s32.totalorder %s23, 1
      %s576 = scalar_select %p575, %s23, 1
      %p577 = scmp.lt.s32.totalorder %s24, 1
      %s578 = scalar_select %p577, %s24, 1
      %s579 = smul.addr %s576, 2
      %s580 = sadd.s32 %s578, %s579
      %s581 = smul.addr %s580, 8
      %s582 = scalar_lea.vmem %s6, %s581
      %s583 = smul.u32 %s23, 2
      %s584 = sadd.s32 %s583, %s24
      %p585 = scmp.lt.s32.totalorder %s584, 3
      %s586 = scalar_select %p585, %s584, 3
      %s587 = scalar_lea.vmem %s7, %s586
      // Predicated region
      $region45: #{full_model_forward.1} parent=43 // pred_check
        %p588 = pneg %p191
      $region46: #{full_model_forward.1} parent=43 // pred_check_branch
        %590 = sbr.rel (%p588) target = $region48
      $region47: #{full_model_forward.1} parent=43 // pred_region
        _
      $region48: #{full_model_forward.1} parent=43 // pred_fallthru
        _
      // Predicated region
      $region49: #{full_model_forward.1} parent=43 // pred_check
        %p591 = pneg %p221
      $region50: #{full_model_forward.1} parent=43 // pred_check_branch
        %593 = sbr.rel (%p591) target = $region52
      $region51: #{full_model_forward.1} parent=43 // pred_region
        %s594 = smul.u32 %s23, 2
        %s595 = sadd.s32 %s594, %s24
      $region52: #{full_model_forward.1} parent=43 // pred_fallthru
        _
    $region44: #{full_model_forward.1} parent=5 // pred_fallthru
      _
    %p596 = scmp.le.s32.totalorder 2, %s14
    // Predicated region
    $region53: #{full_model_forward.1} parent=5 // pred_check
      %p597 = pneg %p596
    $region54: #{full_model_forward.1} parent=5 // pred_check_branch
      %599 = sbr.rel (%p597) target = $region56
    $region55: #{full_model_forward.1} parent=5 // pred_region
      %s600 = ssub.s32 %s14, 2
      // Predicated region
      $region57: #{full_model_forward.1} parent=55 // pred_check
        %p601 = pneg %p197
      $region58: #{full_model_forward.1} parent=55 // pred_check_branch
        %603 = sbr.rel (%p601) target = $region60
      $region59: #{full_model_forward.1} parent=55 // pred_region
        %p604 = scmp.lt.s32.totalorder %s25, 1
        %s605 = scalar_select %p604, %s25, 1
        %p606 = scmp.lt.s32.totalorder %s26, 1
        %s607 = scalar_select %p606, %s26, 1
        %s608 = smul.addr %s605, 2
        %s609 = sadd.s32 %s607, %s608
        %s610 = smul.addr %s609, 8
        %s611 = scalar_lea.vmem %s6, %s610
      $region60: #{full_model_forward.1} parent=55 // pred_fallthru
        _
      // Predicated region
      $region61: #{full_model_forward.1} parent=55 // pred_check
        %p612 = pneg %p227
      $region62: #{full_model_forward.1} parent=55 // pred_check_branch
        %614 = sbr.rel (%p612) target = $region64
      $region63: #{full_model_forward.1} parent=55 // pred_region
        %s615 = smul.u32 %s25, 2
        %s616 = sadd.s32 %s615, %s26
        %p617 = scmp.lt.s32.totalorder %s616, 3
        %s618 = scalar_select %p617, %s616, 3
        %s619 = scalar_lea.vmem %s7, %s618
      $region64: #{full_model_forward.1} parent=55 // pred_fallthru
        _
    $region56: #{full_model_forward.1} parent=5 // pred_fallthru
      _
  $region6: #{full_model_forward.1} parent=0 // loop_footer
    %s18 = sadd.s32 1, %s14
  $region7: #{full_model_forward.1} parent=0 // loop_footer_branch
    %13 = sbr.rel target = $region3
  $region8: #{full_model_forward.1} parent=0 // loop_exit
    _

</llo_original>
